<compile_context>
chip_gen: v6e
topology: v6e:2x2x1
jax: 0.10.0
libtpu: 0.0.40
codegen_flags: <defaults>
</compile_context>

<pallas_src>
import functools

import jax
import jax.numpy as jnp
from jax import lax
from jax.experimental import pallas as pl
from jax.experimental.pallas import tpu as pltpu
import numpy as np


def _tap_accumulate(s_ref, row0, *, Kh, Kw, Wx, Ho, Wo):
    """Shift-and-add over the Kh*Kw taps for one (batch, template) pair.

    s_ref rows [row0, row0 + Kh*Kw) hold the per-tap channel contractions
    (tap-major, tap t = i*Kw + j):  s[t, p] = sum_c z[t, c] * x[c, p],
    p a flat search-map index.

    Returns the flat correlation map, shape (1, Q), Q = (Ho-1)*Wx + Wo.

    Two-level reduction keeps the adds sublane-dense:
      level 1 (dense):  A[j, p] = sum_i s[row0 + i*Kw + j, p + i*Wx]
                        -> Kh adds of contiguous (Kw, QP) slabs, QP = Ho*Wx
      level 2 (small):  acc[q]  = sum_j A[j, q + j]
    """
    Q = (Ho - 1) * Wx + Wo
    QP = Ho * Wx                       # max read index = (Kh-1)*Wx + QP - 1 = HW - 1

    # Level 1: full-vreg slab adds straight from VMEM scratch.
    A = s_ref[row0:row0 + Kw, 0:QP]
    for i in range(1, Kh):
        r = row0 + i * Kw
        A = A + s_ref[r:r + Kw, i * Wx:i * Wx + QP]

    # Level 2: combine the Kw rows with their lane offsets (j + Q <= QP).
    acc = A[0:1, 0:Q]
    for j in range(1, Kw):
        acc = acc + A[j:j + 1, j:j + Q]
    return acc                          # (1, Q) f32


def _corr_train_kernel(x_ref, z_ref, o_ref, s_ref, *, Kh, Kw, Wx, Ho, Wo):
    """Grouped per-batch correlation for one block of Bt search maps.

    x_ref: (Bt, C, HW)   bf16 search features, spatial flattened (lane-dense)
    z_ref: (Bt, T, C)    bf16 template taps, tap-major rows
    o_ref: (Bt, QP)      flat correlation maps, QP = Ho*Wx (tail Kw-1 cols unused)
    s_ref: (Bt*T, HW)    f32 VMEM scratch, rows b*T + t (batch-major)
    """
    Bt = x_ref.shape[0]
    T = Kh * Kw
    Q = (Ho - 1) * Wx + Wo

    # Channel contraction on the MXU, one matmul per search map; results go
    # straight to VMEM scratch so vreg pressure stays bounded.
    for b in range(Bt):
        s_ref[b * T:(b + 1) * T, :] = jnp.dot(
            z_ref[b], x_ref[b], preferred_element_type=jnp.float32)

    rows = [
        _tap_accumulate(s_ref, b * T, Kh=Kh, Kw=Kw, Wx=Wx, Ho=Ho, Wo=Wo)
        for b in range(Bt)
    ]
    out = 0.1 * jnp.concatenate(rows, axis=0)          # (Bt, Q) f32
    # Tail columns [Q, QP) map to discarded output positions; leave unwritten.
    o_ref[:, :Q] = out.astype(o_ref.dtype)


def _corr_eval_kernel(x_ref, z_ref, o_ref, s_ref, *, Kh, Kw, Wx, Ho, Wo, Gz):
    """Full conv: one search map against Gz templates.

    x_ref: (1, C, HW)     bf16 search features
    z_ref: (1, Gz*T, C)   bf16 template taps, template-major rows (n*T + t)
    o_ref: (1, Gz, QP)    flat correlation maps per template
    s_ref: (Gz*T, HW)     f32 VMEM scratch
    """
    T = Kh * Kw
    Q = (Ho - 1) * Wx + Wo

    # One MXU matmul contracts channels for every tap of every template.
    s_ref[...] = jnp.dot(z_ref[0], x_ref[0], preferred_element_type=jnp.float32)

    rows = [
        _tap_accumulate(s_ref, n * T, Kh=Kh, Kw=Kw, Wx=Wx, Ho=Ho, Wo=Wo)
        for n in range(Gz)
    ]
    out = 0.1 * jnp.concatenate(rows, axis=0)          # (Gz, Q) f32
    o_ref[0, :, :Q] = out.astype(o_ref.dtype)


def _pick_bt(Bx):
    """Largest batch block (<= 8) that divides Bx."""
    for bt in (8, 4, 2, 1):
        if Bx % bt == 0:
            return bt
    return 1


def siamfc_corr(x_f, z_f, *, training=True):
    """Pallas implementation of SiamFCCorr.forward. Returns {'cls': ...}."""
    Bx, C, Hx, Wx = x_f.shape
    Bz, Cz, Kh, Kw = z_f.shape
    assert C == Cz, "channel mismatch between x_f and z_f"
    Ho, Wo = Hx - Kh + 1, Wx - Kw + 1
    HW, T = Hx * Wx, Kh * Kw
    QP = Ho * Wx                       # flat output width (reshape-friendly)
    out_dtype = x_f.dtype

    # bf16 halves the HBM traffic of this HBM-bound kernel; MXU accumulates f32.
    xw = x_f.reshape(Bx, C, HW).astype(jnp.bfloat16)

    if training:
        # Grouped per-batch correlation: output (B, 1, Ho, Wo).
        assert Bx == Bz, "training path requires matching batch sizes"
        zw = z_f.reshape(Bz, C, T).transpose(0, 2, 1).astype(jnp.bfloat16)   # (B, T, C)
        Bt = _pick_bt(Bx)

        kernel = functools.partial(
            _corr_train_kernel, Kh=Kh, Kw=Kw, Wx=Wx, Ho=Ho, Wo=Wo)

        flat = pl.pallas_call(
            kernel,
            out_shape=jax.ShapeDtypeStruct((Bx, QP), out_dtype),
            grid_spec=pltpu.PrefetchScalarGridSpec(
                num_scalar_prefetch=0,
                grid=(Bx // Bt,),
                in_specs=[
                    pl.BlockSpec((Bt, C, HW), lambda b: (b, 0, 0)),
                    pl.BlockSpec((Bt, T, C), lambda b: (b, 0, 0)),
                ],
                out_specs=pl.BlockSpec((Bt, QP), lambda b: (b, 0)),
                scratch_shapes=[pltpu.VMEM((Bt * T, HW), jnp.float32)],
            ),
            compiler_params=pltpu.CompilerParams(
                dimension_semantics=("parallel",),
                vmem_limit_bytes=32 * 1024 * 1024),
        )(xw, zw)

        cls = flat.reshape(Bx, Ho, Wx)[..., :Wo][:, None]        # (B, 1, Ho, Wo)
        return {"cls": cls}
    else:
        # Full conv: every x_f against every z_f kernel: (Bx, Bz, Ho, Wo).
        # Split templates into >= 2 groups when Bx == 1 so the grid has enough
        # steps for v7x's two TensorCores and for DMA/compute overlap.
        n_zg = 2 if (Bx == 1 and Bz >= 2 and Bz % 2 == 0) else 1
        Gz = Bz // n_zg
        # Rows template-major (n*T + t), tap-major within each template.
        zw = (z_f.reshape(Bz, C, T).transpose(0, 2, 1)
              .reshape(n_zg, Gz * T, C).astype(jnp.bfloat16))

        kernel = functools.partial(
            _corr_eval_kernel, Kh=Kh, Kw=Kw, Wx=Wx, Ho=Ho, Wo=Wo, Gz=Gz)

        flat = pl.pallas_call(
            kernel,
            out_shape=jax.ShapeDtypeStruct((Bx, Bz, QP), out_dtype),
            grid_spec=pltpu.PrefetchScalarGridSpec(
                num_scalar_prefetch=0,
                grid=(Bx, n_zg),
                in_specs=[
                    pl.BlockSpec((1, C, HW), lambda b, g: (b, 0, 0)),
                    pl.BlockSpec((1, Gz * T, C), lambda b, g: (g, 0, 0)),
                ],
                out_specs=pl.BlockSpec((1, Gz, QP), lambda b, g: (b, g, 0)),
                scratch_shapes=[pltpu.VMEM((Gz * T, HW), jnp.float32)],
            ),
            compiler_params=pltpu.CompilerParams(
                dimension_semantics=("parallel", "parallel"),
                vmem_limit_bytes=32 * 1024 * 1024),
        )(xw, zw)

        cls = flat.reshape(Bx, Bz, Ho, Wx)[..., :Wo]             # (Bx, Bz, Ho, Wo)
        return {"cls": cls}


def _reference(x_f, z_f, *, training=True):
    """Pure-JAX reference matching F.conv2d semantics (NCHW / OIHW)."""
    dn = ("NCHW", "OIHW", "NCHW")
    if training:
        outs = [
            lax.conv_general_dilated(
                x_f[b:b + 1], z_f[b:b + 1], window_strides=(1, 1),
                padding="VALID", dimension_numbers=dn,
                precision=lax.Precision.HIGHEST)
            for b in range(x_f.shape[0])
        ]
        return 0.1 * jnp.concatenate(outs, axis=0)
    else:
        return 0.1 * lax.conv_general_dilated(
            x_f, z_f, window_strides=(1, 1), padding="VALID",
            dimension_numbers=dn, precision=lax.Precision.HIGHEST)


if __name__ == "__main__":
    # Small, deterministic shapes consistent with the SiamFC head:
    #   search features x_f: (B, C, 16, 16), template features z_f: (B, C, 8, 8)
    B, C, Hx, Wx, Kh, Kw = 2, 4, 16, 16, 8, 8
    key = jax.random.PRNGKey(0)
    kx, kz = jax.random.split(key)
    x_f = jax.random.normal(kx, (B, C, Hx, Wx), dtype=jnp.float32)
    z_f = jax.random.normal(kz, (B, C, Kh, Kw), dtype=jnp.float32)

    # The kernel computes with bf16 inputs (f32 accumulation); compare against
    # an f32 reference fed with bf16-rounded inputs so tolerances stay tight.
    x_bf = x_f.astype(jnp.bfloat16).astype(jnp.float32)
    z_bf = z_f.astype(jnp.bfloat16).astype(jnp.float32)

    # Training path (module default: grouped per-batch correlation).
    out_train = siamfc_corr(x_f, z_f, training=True)["cls"]
    jax.block_until_ready(out_train)
    ref_train = _reference(x_bf, z_bf, training=True)
    np.testing.assert_allclose(np.asarray(out_train), np.asarray(ref_train),
                               rtol=5e-3, atol=5e-3)

    # Eval path (plain F.conv2d with z_f as the weight).
    out_eval = siamfc_corr(x_f, z_f, training=False)["cls"]
    jax.block_until_ready(out_eval)
    ref_eval = _reference(x_bf, z_bf, training=False)
    np.testing.assert_allclose(np.asarray(out_eval), np.asarray(ref_eval),
                               rtol=5e-3, atol=5e-3)

    print("KERNEL_OK")
</pallas_src>

<mosaic_0001>
module attributes {stable_mosaic.version = 11 : i64} {
  func.func @_corr_train_kernel(%arg0: i32, %arg1: memref<2x4x256xbf16, #tpu.memory_space<vmem>>, %arg2: memref<2x64x4xbf16, #tpu.memory_space<vmem>>, %arg3: memref<2x144xf32, #tpu.memory_space<vmem>>, %arg4: memref<128x256xf32, #tpu.memory_space<vmem>>) attributes {dimension_semantics = [#tpu.dimension_semantics<parallel>], iteration_bounds = array<i64: 1>, scalar_prefetch = 0 : i64, scratch_operands = 1 : i64, tpu.core_type = #tpu.core_type<tc>, window_params = [{transform_indices = @transform_0, window_bounds = array<i64: 2, 4, 256>}, {transform_indices = @transform_1, window_bounds = array<i64: 2, 64, 4>}, {transform_indices = @transform_2, window_bounds = array<i64: 2, 144>}]} {
    %c0 = arith.constant 0 : index
    %c0_0 = arith.constant 0 : index
    %c0_1 = arith.constant 0 : index
    %0 = vector.load %arg2[%c0, %c0_0, %c0_1] : memref<2x64x4xbf16, #tpu.memory_space<vmem>>, vector<1x64x4xbf16>
    %1 = vector.shape_cast %0 : vector<1x64x4xbf16> to vector<64x4xbf16>
    %c0_2 = arith.constant 0 : index
    %c0_3 = arith.constant 0 : index
    %c0_4 = arith.constant 0 : index
    %2 = vector.load %arg1[%c0_2, %c0_3, %c0_4] : memref<2x4x256xbf16, #tpu.memory_space<vmem>>, vector<1x4x256xbf16>
    %3 = vector.shape_cast %2 : vector<1x4x256xbf16> to vector<4x256xbf16>
    %cst = arith.constant dense<0.000000e+00> : vector<64x256xf32>
    %4 = tpu.matmul %1, %3, %cst {dimension_numbers = #tpu.dot_dimension_numbers<[1], [0], [0], [1], [0, 0, 1, 1], [], []>} : vector<64x4xbf16>, vector<4x256xbf16>, vector<64x256xf32> -> vector<64x256xf32>
    %c0_5 = arith.constant 0 : index
    %c0_6 = arith.constant 0 : index
    %5 = vector.load %arg4[%c0_5, %c0_6] : memref<128x256xf32, #tpu.memory_space<vmem>>, vector<64x256xf32>
    tpu.vector_store %arg4[%c0_5, %c0_6], %4 {strides = array<i32>} : memref<128x256xf32, #tpu.memory_space<vmem>>, vector<64x256xf32>,
    %c1 = arith.constant 1 : index
    %c0_7 = arith.constant 0 : index
    %c0_8 = arith.constant 0 : index
    %6 = vector.load %arg2[%c1, %c0_7, %c0_8] : memref<2x64x4xbf16, #tpu.memory_space<vmem>>, vector<1x64x4xbf16>
    %7 = vector.shape_cast %6 : vector<1x64x4xbf16> to vector<64x4xbf16>
    %c1_9 = arith.constant 1 : index
    %c0_10 = arith.constant 0 : index
    %c0_11 = arith.constant 0 : index
    %8 = vector.load %arg1[%c1_9, %c0_10, %c0_11] : memref<2x4x256xbf16, #tpu.memory_space<vmem>>, vector<1x4x256xbf16>
    %9 = vector.shape_cast %8 : vector<1x4x256xbf16> to vector<4x256xbf16>
    %cst_12 = arith.constant dense<0.000000e+00> : vector<64x256xf32>
    %10 = tpu.matmul %7, %9, %cst_12 {dimension_numbers = #tpu.dot_dimension_numbers<[1], [0], [0], [1], [0, 0, 1, 1], [], []>} : vector<64x4xbf16>, vector<4x256xbf16>, vector<64x256xf32> -> vector<64x256xf32>
    %c64 = arith.constant 64 : index
    %c0_13 = arith.constant 0 : index
    %11 = vector.load %arg4[%c64, %c0_13] : memref<128x256xf32, #tpu.memory_space<vmem>>, vector<64x256xf32>
    tpu.vector_store %arg4[%c64, %c0_13], %10 {strides = array<i32>} : memref<128x256xf32, #tpu.memory_space<vmem>>, vector<64x256xf32>,
    %c0_14 = arith.constant 0 : index
    %c0_15 = arith.constant 0 : index
    %12 = vector.load %arg4[%c0_14, %c0_15] : memref<128x256xf32, #tpu.memory_space<vmem>>, vector<8x144xf32>
    %c8 = arith.constant 8 : index
    %c16 = arith.constant 16 : index
    %13 = vector.load %arg4[%c8, %c16] : memref<128x256xf32, #tpu.memory_space<vmem>>, vector<8x144xf32>
    %14 = arith.addf %12, %13 : vector<8x144xf32>
    %c16_16 = arith.constant 16 : index
    %c32 = arith.constant 32 : index
    %15 = vector.load %arg4[%c16_16, %c32] : memref<128x256xf32, #tpu.memory_space<vmem>>, vector<8x144xf32>
    %16 = arith.addf %14, %15 : vector<8x144xf32>
    %c24 = arith.constant 24 : index
    %c48 = arith.constant 48 : index
    %17 = vector.load %arg4[%c24, %c48] : memref<128x256xf32, #tpu.memory_space<vmem>>, vector<8x144xf32>
    %18 = arith.addf %16, %17 : vector<8x144xf32>
    %c32_17 = arith.constant 32 : index
    %c64_18 = arith.constant 64 : index
    %19 = vector.load %arg4[%c32_17, %c64_18] : memref<128x256xf32, #tpu.memory_space<vmem>>, vector<8x144xf32>
    %20 = arith.addf %18, %19 : vector<8x144xf32>
    %c40 = arith.constant 40 : index
    %c80 = arith.constant 80 : index
    %21 = vector.load %arg4[%c40, %c80] : memref<128x256xf32, #tpu.memory_space<vmem>>, vector<8x144xf32>
    %22 = arith.addf %20, %21 : vector<8x144xf32>
    %c48_19 = arith.constant 48 : index
    %c96 = arith.constant 96 : index
    %23 = vector.load %arg4[%c48_19, %c96] : memref<128x256xf32, #tpu.memory_space<vmem>>, vector<8x144xf32>
    %24 = arith.addf %22, %23 : vector<8x144xf32>
    %c56 = arith.constant 56 : index
    %c112 = arith.constant 112 : index
    %25 = vector.load %arg4[%c56, %c112] : memref<128x256xf32, #tpu.memory_space<vmem>>, vector<8x144xf32>
    %26 = arith.addf %24, %25 : vector<8x144xf32>
    %27 = vector.extract_strided_slice %26 {offsets = [0, 0], sizes = [1, 137], strides = [1, 1]} : vector<8x144xf32> to vector<1x137xf32>
    %28 = vector.extract_strided_slice %26 {offsets = [1, 1], sizes = [1, 137], strides = [1, 1]} : vector<8x144xf32> to vector<1x137xf32>
    %29 = arith.addf %27, %28 : vector<1x137xf32>
    %30 = vector.extract_strided_slice %26 {offsets = [2, 2], sizes = [1, 137], strides = [1, 1]} : vector<8x144xf32> to vector<1x137xf32>
    %31 = arith.addf %29, %30 : vector<1x137xf32>
    %32 = vector.extract_strided_slice %26 {offsets = [3, 3], sizes = [1, 137], strides = [1, 1]} : vector<8x144xf32> to vector<1x137xf32>
    %33 = arith.addf %31, %32 : vector<1x137xf32>
    %34 = vector.extract_strided_slice %26 {offsets = [4, 4], sizes = [1, 137], strides = [1, 1]} : vector<8x144xf32> to vector<1x137xf32>
    %35 = arith.addf %33, %34 : vector<1x137xf32>
    %36 = vector.extract_strided_slice %26 {offsets = [5, 5], sizes = [1, 137], strides = [1, 1]} : vector<8x144xf32> to vector<1x137xf32>
    %37 = arith.addf %35, %36 : vector<1x137xf32>
    %38 = vector.extract_strided_slice %26 {offsets = [6, 6], sizes = [1, 137], strides = [1, 1]} : vector<8x144xf32> to vector<1x137xf32>
    %39 = arith.addf %37, %38 : vector<1x137xf32>
    %40 = vector.extract_strided_slice %26 {offsets = [7, 7], sizes = [1, 137], strides = [1, 1]} : vector<8x144xf32> to vector<1x137xf32>
    %41 = arith.addf %39, %40 : vector<1x137xf32>
    %c64_20 = arith.constant 64 : index
    %c0_21 = arith.constant 0 : index
    %42 = vector.load %arg4[%c64_20, %c0_21] : memref<128x256xf32, #tpu.memory_space<vmem>>, vector<8x144xf32>
    %c72 = arith.constant 72 : index
    %c16_22 = arith.constant 16 : index
    %43 = vector.load %arg4[%c72, %c16_22] : memref<128x256xf32, #tpu.memory_space<vmem>>, vector<8x144xf32>
    %44 = arith.addf %42, %43 : vector<8x144xf32>
    %c80_23 = arith.constant 80 : index
    %c32_24 = arith.constant 32 : index
    %45 = vector.load %arg4[%c80_23, %c32_24] : memref<128x256xf32, #tpu.memory_space<vmem>>, vector<8x144xf32>
    %46 = arith.addf %44, %45 : vector<8x144xf32>
    %c88 = arith.constant 88 : index
    %c48_25 = arith.constant 48 : index
    %47 = vector.load %arg4[%c88, %c48_25] : memref<128x256xf32, #tpu.memory_space<vmem>>, vector<8x144xf32>
    %48 = arith.addf %46, %47 : vector<8x144xf32>
    %c96_26 = arith.constant 96 : index
    %c64_27 = arith.constant 64 : index
    %49 = vector.load %arg4[%c96_26, %c64_27] : memref<128x256xf32, #tpu.memory_space<vmem>>, vector<8x144xf32>
    %50 = arith.addf %48, %49 : vector<8x144xf32>
    %c104 = arith.constant 104 : index
    %c80_28 = arith.constant 80 : index
    %51 = vector.load %arg4[%c104, %c80_28] : memref<128x256xf32, #tpu.memory_space<vmem>>, vector<8x144xf32>
    %52 = arith.addf %50, %51 : vector<8x144xf32>
    %c112_29 = arith.constant 112 : index
    %c96_30 = arith.constant 96 : index
    %53 = vector.load %arg4[%c112_29, %c96_30] : memref<128x256xf32, #tpu.memory_space<vmem>>, vector<8x144xf32>
    %54 = arith.addf %52, %53 : vector<8x144xf32>
    %c120 = arith.constant 120 : index
    %c112_31 = arith.constant 112 : index
    %55 = vector.load %arg4[%c120, %c112_31] : memref<128x256xf32, #tpu.memory_space<vmem>>, vector<8x144xf32>
    %56 = arith.addf %54, %55 : vector<8x144xf32>
    %57 = vector.extract_strided_slice %56 {offsets = [0, 0], sizes = [1, 137], strides = [1, 1]} : vector<8x144xf32> to vector<1x137xf32>
    %58 = vector.extract_strided_slice %56 {offsets = [1, 1], sizes = [1, 137], strides = [1, 1]} : vector<8x144xf32> to vector<1x137xf32>
    %59 = arith.addf %57, %58 : vector<1x137xf32>
    %60 = vector.extract_strided_slice %56 {offsets = [2, 2], sizes = [1, 137], strides = [1, 1]} : vector<8x144xf32> to vector<1x137xf32>
    %61 = arith.addf %59, %60 : vector<1x137xf32>
    %62 = vector.extract_strided_slice %56 {offsets = [3, 3], sizes = [1, 137], strides = [1, 1]} : vector<8x144xf32> to vector<1x137xf32>
    %63 = arith.addf %61, %62 : vector<1x137xf32>
    %64 = vector.extract_strided_slice %56 {offsets = [4, 4], sizes = [1, 137], strides = [1, 1]} : vector<8x144xf32> to vector<1x137xf32>
    %65 = arith.addf %63, %64 : vector<1x137xf32>
    %66 = vector.extract_strided_slice %56 {offsets = [5, 5], sizes = [1, 137], strides = [1, 1]} : vector<8x144xf32> to vector<1x137xf32>
    %67 = arith.addf %65, %66 : vector<1x137xf32>
    %68 = vector.extract_strided_slice %56 {offsets = [6, 6], sizes = [1, 137], strides = [1, 1]} : vector<8x144xf32> to vector<1x137xf32>
    %69 = arith.addf %67, %68 : vector<1x137xf32>
    %70 = vector.extract_strided_slice %56 {offsets = [7, 7], sizes = [1, 137], strides = [1, 1]} : vector<8x144xf32> to vector<1x137xf32>
    %71 = arith.addf %69, %70 : vector<1x137xf32>
    %72 = tpu.concatenate %41, %71 in 0 : vector<1x137xf32>, vector<1x137xf32> -> vector<2x137xf32>
    %cst_32 = arith.constant 1.000000e-01 : f32
    %73 = vector.broadcast %cst_32 : f32 to vector<2x137xf32>
    %74 = arith.mulf %73, %72 : vector<2x137xf32>
    %c0_33 = arith.constant 0 : index
    %c0_34 = arith.constant 0 : index
    %75 = vector.load %arg3[%c0_33, %c0_34] : memref<2x144xf32, #tpu.memory_space<vmem>>, vector<2x137xf32>
    tpu.vector_store %arg3[%c0_33, %c0_34], %74 {strides = array<i32>} : memref<2x144xf32, #tpu.memory_space<vmem>>, vector<2x137xf32>,
    return
  }
  func.func @transform_0(%arg0: i32) -> (i32, i32, i32) {
    %c0_i32 = arith.constant 0 : i32
    %c0_i32_0 = arith.constant 0 : i32
    %c0_i32_1 = arith.constant 0 : i32
    return %arg0, %c0_i32, %c0_i32_0 : i32, i32, i32
  }
  func.func @transform_1(%arg0: i32) -> (i32, i32, i32) {
    %c0_i32 = arith.constant 0 : i32
    %c0_i32_0 = arith.constant 0 : i32
    %c0_i32_1 = arith.constant 0 : i32
    return %arg0, %c0_i32, %c0_i32_0 : i32, i32, i32
  }
  func.func @transform_2(%arg0: i32) -> (i32, i32) {
    %c0_i32 = arith.constant 0 : i32
    %c0_i32_0 = arith.constant 0 : i32
    return %arg0, %c0_i32 : i32, i32
  }
}

</mosaic_0001>

<llo_original>
// kernel: tpu_custom_call.1
$region0: #{tpu_custom_call.1}
  #allocation0 [shape = 'u32[]', space=smem, size = 0x4, offset = 0x4, fixed_abs, tag = 'smem constant byte address 0x4 - core index']
  #allocation1 [shape = 'u32[144,128]{1,0:T(1,128)}', space=vmem, size = 0x12000, scoped, tag = 'internal scratch']
  #allocation2 [shape = 'f32[128,256]{1,0:T(8,128)}', space=vmem, size = 0x20000, scoped, tag = 'scratch operand']
  %s0 = inlined_call_operand.vmem [shape: bf16[2,4,256], index: 0, kind: input, shape index: {}]
  %s1 = inlined_call_operand.vmem [shape: bf16[2,64,4], index: 1, kind: input, shape index: {}]
  %s2 = inlined_call_operand.hbm [shape: f32[2,144], index: 2, kind: output, shape index: {}]
  %s3 = sld [smem:[#allocation0]]
  $region18: #{tpu_custom_call.1} parent=0
    _
  %s5 = ssub.s32 1, %s3
  %s6 = scalar_select 0, %s5, %s3
  $region1: #{tpu_custom_call.1} parent=0
    #allocation3 [shape = 'u8[2048]{0}', space=vmem, size = 0x800, scoped, tag = 'output window, operand 0, single buffered']
    #allocation4 [shape = 's32[1]{0}', space=sflag, size = 0x4, scoped, tag = 'scoped memory for tpu_custom_call.1']
    %7 = vsyncpa [#allocation4], 0
    // Predicated region
    $region2: #{tpu_custom_call.1} parent=1 // pred_check
      _
    $region3: #{tpu_custom_call.1} parent=1 // pred_check_branch
      %9 = sbr.rel (0) target = $region5
    $region4: #{tpu_custom_call.1} parent=1 // pred_region
      _
    $region5: #{tpu_custom_call.1} parent=1 // pred_fallthru
      _
    // Predicated region
    $region6: #{tpu_custom_call.1} parent=1 // pred_check
      _
    $region7: #{tpu_custom_call.1} parent=1 // pred_check_branch
      %11 = sbr.rel (0) target = $region9
    $region8: #{tpu_custom_call.1} parent=1 // pred_region
      _
    $region9: #{tpu_custom_call.1} parent=1 // pred_fallthru
      _
    %v13 = vld [vmem:[%s1] sm:$0xf]
    %v14 = vld [vmem:[%s1 + $0x4] sm:$0xf]
    %v15 = vld [vmem:[%s1 + $0x8] sm:$0xf]
    %v16 = vld [vmem:[%s1 + $0xc] sm:$0xf]
    %v17 = vld [vmem:[%s1 + $0x10] sm:$0xf]
    %v18 = vld [vmem:[%s1 + $0x14] sm:$0xf]
    %v19 = vld [vmem:[%s1 + $0x18] sm:$0xf]
    %v20 = vld [vmem:[%s1 + $0x1c] sm:$0xf]
    %v21 = vld [vmem:[%s0] sm:$0xf]
    %v30 = vunpack.c.l.b16 %v13
    %v31 = vunpack.c.l.b16 %v14
    %v32 = vunpack.c.l.b16 %v15
    %v33 = vunpack.c.l.b16 %v16
    %v34 = vunpack.c.l.b16 %v17
    %v35 = vunpack.c.l.b16 %v18
    %v36 = vunpack.c.l.b16 %v19
    %v37 = vunpack.c.l.b16 %v20
    %v38 = vpack.c.b16 %v31, %v30
    %v39 = vpack.c.b16 %v33, %v32
    %v40 = vpack.c.b16 %v35, %v34
    %v41 = vpack.c.b16 %v37, %v36
    %v44 = vunpack.c.l.s4 1983009808
    %v45 = vunpack.c.0.s8 %v44
    %v46 = vlaneseq
    %v47 = vshrl.u32 %v46, 7
    %v48 = vsub.s32 %v45, %v47
    %v49 = vrot.slane %v21, %v48
    %v50 = vcombine.high %v49, %v49
    %vm51 = vcmask 31744
    %v53 = vsel %vm51, %v38, 0
    %v56 = vsel %vm51, %v39, 0
    %v59 = vsel %vm51, %v40, 0
    %v62 = vsel %vm51, %v41, 0
    %vm64 = vcmask 1041408
    %v66 = vsel %vm64, %v49, 0
    %v69 = vsel %vm64, %v50, 0
    %71 = vmatprep.subr.bf16.mxu0 0
    %72 = vmatpush1.bf16.msra.mxu0 0
    %73 = vmatprep.subr.bf16.mxu0 0
    %74 = vmatpush1.bf16.msra.mxu0 0
    %75 = vmatprep.subr.bf16.mxu0 0
    %76 = vmatpush1.bf16.msra.mxu0 0
    %77 = vmatprep.subr.bf16.mxu0 0
    %78 = vmatpush1.bf16.msra.mxu0 0
    %79 = vmatprep.subr.bf16.mxu0 0
    %80 = vmatpush1.bf16.msra.mxu0 0
    %81 = vmatprep.subr.bf16.mxu0 0
    %82 = vmatpush1.bf16.msra.mxu0 0
    %83 = vmatprep.subr.bf16.mxu0 0
    %84 = vmatpush1.bf16.msra.mxu0 0
    %85 = vmatprep.subr.bf16.mxu0 %v69
    %86 = vmatpush1.bf16.msra.mxu0 %v66
    %87 = vmatprep.subr.bf16.mxu0 0
    %88 = vmatpush2.bf16.msra.mxu0 0
    %89 = vmatprep.subr.bf16.mxu0 0
    %90 = vmatpush2.bf16.msra.mxu0 0
    %91 = vmatprep.subr.bf16.mxu0 0
    %92 = vmatpush2.bf16.msra.mxu0 0
    %93 = vmatprep.subr.bf16.mxu0 0
    %94 = vmatpush2.bf16.msra.mxu0 0
    %95 = vmatprep.subr.bf16.mxu0 0
    %96 = vmatpush2.bf16.msra.mxu0 0
    %97 = vmatprep.subr.bf16.mxu0 0
    %98 = vmatpush2.bf16.msra.mxu0 0
    %99 = vmatprep.subr.bf16.mxu0 0
    %100 = vmatpush2.bf16.msra.mxu0 0
    %101 = vmatprep.subr.bf16.mxu0 0
    %102 = vmatpush2.bf16.msra.mxu0 0
    %103 = vmatprep.mubr.bf16.mxu0 0
    %104 = vmatmul.mubr.bf16.gmra.mxu0 %v53
    %v105 = vpop.f32.mrf.mxu0
    %v106 = vadd.f32 0.0, %v105
    %v107 = vpop.f32.mrf.mxu0
    %v108 = vadd.f32 0.0, %v107
    %v109 = vpop.f32.mrf.mxu0
    %v110 = vadd.f32 0.0, %v109
    %v111 = vpop.f32.mrf.mxu0
    %v112 = vadd.f32 0.0, %v111
    %113 = vmatprep.mubr.bf16.mxu0 0
    %114 = vmatmul.mubr.bf16.gmra.mxu0 %v56
    %v115 = vpop.f32.mrf.mxu0
    %v116 = vadd.f32 0.0, %v115
    %v117 = vpop.f32.mrf.mxu0
    %v118 = vadd.f32 0.0, %v117
    %v119 = vpop.f32.mrf.mxu0
    %v120 = vadd.f32 0.0, %v119
    %v121 = vpop.f32.mrf.mxu0
    %v122 = vadd.f32 0.0, %v121
    %123 = vmatprep.mubr.bf16.mxu0 0
    %124 = vmatmul.mubr.bf16.gmra.mxu0 %v59
    %v125 = vpop.f32.mrf.mxu0
    %v126 = vadd.f32 0.0, %v125
    %v127 = vpop.f32.mrf.mxu0
    %v128 = vadd.f32 0.0, %v127
    %v129 = vpop.f32.mrf.mxu0
    %v130 = vadd.f32 0.0, %v129
    %v131 = vpop.f32.mrf.mxu0
    %v132 = vadd.f32 0.0, %v131
    %133 = vmatprep.mubr.bf16.mxu0 0
    %134 = vmatmul.mubr.bf16.gmra.mxu0 %v62
    %v135 = vpop.f32.mrf.mxu0
    %v136 = vadd.f32 0.0, %v135
    %v137 = vpop.f32.mrf.mxu0
    %v138 = vadd.f32 0.0, %v137
    %v139 = vpop.f32.mrf.mxu0
    %v140 = vadd.f32 0.0, %v139
    %v141 = vpop.f32.mrf.mxu0
    %v142 = vadd.f32 0.0, %v141
    %143 = vdwg.mxu0
    %144 = vst [vmem:[#allocation2] sm:$0xff] %v106
    %145 = vst [vmem:[#allocation2 + $0x8] sm:$0xff] %v108
    %146 = vst [vmem:[#allocation2 + $0x10] sm:$0xff] %v110
    %147 = vst [vmem:[#allocation2 + $0x18] sm:$0xff] %v112
    %148 = vst [vmem:[#allocation2 + $0x20] sm:$0xff] %v116
    %149 = vst [vmem:[#allocation2 + $0x28] sm:$0xff] %v118
    %150 = vst [vmem:[#allocation2 + $0x30] sm:$0xff] %v120
    %151 = vst [vmem:[#allocation2 + $0x38] sm:$0xff] %v122
    %152 = vst [vmem:[#allocation2 + $0x40] sm:$0xff] %v126
    %153 = vst [vmem:[#allocation2 + $0x48] sm:$0xff] %v128
    %154 = vst [vmem:[#allocation2 + $0x50] sm:$0xff] %v130
    %155 = vst [vmem:[#allocation2 + $0x58] sm:$0xff] %v132
    %156 = vst [vmem:[#allocation2 + $0x60] sm:$0xff] %v136
    %157 = vst [vmem:[#allocation2 + $0x68] sm:$0xff] %v138
    %158 = vst [vmem:[#allocation2 + $0x70] sm:$0xff] %v140
    %159 = vst [vmem:[#allocation2 + $0x78] sm:$0xff] %v142
    %s160 = scalar_lea.vmem %s1, 32
    %v161 = vld [vmem:[%s160] sm:$0xf]
    %v162 = vld [vmem:[%s160 + $0x4] sm:$0xf]
    %v163 = vld [vmem:[%s160 + $0x8] sm:$0xf]
    %v164 = vld [vmem:[%s160 + $0xc] sm:$0xf]
    %v165 = vld [vmem:[%s160 + $0x10] sm:$0xf]
    %v166 = vld [vmem:[%s160 + $0x14] sm:$0xf]
    %v167 = vld [vmem:[%s160 + $0x18] sm:$0xf]
    %v168 = vld [vmem:[%s160 + $0x1c] sm:$0xf]
    %s169 = scalar_lea.vmem %s0, 4
    %v170 = vld [vmem:[%s169] sm:$0xf]
    %v179 = vunpack.c.l.b16 %v161
    %v180 = vunpack.c.l.b16 %v162
    %v181 = vunpack.c.l.b16 %v163
    %v182 = vunpack.c.l.b16 %v164
    %v183 = vunpack.c.l.b16 %v165
    %v184 = vunpack.c.l.b16 %v166
    %v185 = vunpack.c.l.b16 %v167
    %v186 = vunpack.c.l.b16 %v168
    %v187 = vpack.c.b16 %v180, %v179
    %v188 = vpack.c.b16 %v182, %v181
    %v189 = vpack.c.b16 %v184, %v183
    %v190 = vpack.c.b16 %v186, %v185
    %v193 = vunpack.c.l.s4 1983009808
    %v194 = vunpack.c.0.s8 %v193
    %v195 = vlaneseq
    %v196 = vshrl.u32 %v195, 7
    %v197 = vsub.s32 %v194, %v196
    %v198 = vrot.slane %v170, %v197
    %v199 = vcombine.high %v198, %v198
    %v201 = vsel %vm51, %v187, 0
    %v204 = vsel %vm51, %v188, 0
    %v207 = vsel %vm51, %v189, 0
    %v210 = vsel %vm51, %v190, 0
    %v213 = vsel %vm64, %v198, 0
    %v216 = vsel %vm64, %v199, 0
    %218 = vmatprep.subr.bf16.mxu0 0
    %219 = vmatpush1.bf16.msra.mxu0 0
    %220 = vmatprep.subr.bf16.mxu0 0
    %221 = vmatpush1.bf16.msra.mxu0 0
    %222 = vmatprep.subr.bf16.mxu0 0
    %223 = vmatpush1.bf16.msra.mxu0 0
    %224 = vmatprep.subr.bf16.mxu0 0
    %225 = vmatpush1.bf16.msra.mxu0 0
    %226 = vmatprep.subr.bf16.mxu0 0
    %227 = vmatpush1.bf16.msra.mxu0 0
    %228 = vmatprep.subr.bf16.mxu0 0
    %229 = vmatpush1.bf16.msra.mxu0 0
    %230 = vmatprep.subr.bf16.mxu0 0
    %231 = vmatpush1.bf16.msra.mxu0 0
    %232 = vmatprep.subr.bf16.mxu0 %v216
    %233 = vmatpush1.bf16.msra.mxu0 %v213
    %234 = vmatprep.subr.bf16.mxu0 0
    %235 = vmatpush2.bf16.msra.mxu0 0
    %236 = vmatprep.subr.bf16.mxu0 0
    %237 = vmatpush2.bf16.msra.mxu0 0
    %238 = vmatprep.subr.bf16.mxu0 0
    %239 = vmatpush2.bf16.msra.mxu0 0
    %240 = vmatprep.subr.bf16.mxu0 0
    %241 = vmatpush2.bf16.msra.mxu0 0
    %242 = vmatprep.subr.bf16.mxu0 0
    %243 = vmatpush2.bf16.msra.mxu0 0
    %244 = vmatprep.subr.bf16.mxu0 0
    %245 = vmatpush2.bf16.msra.mxu0 0
    %246 = vmatprep.subr.bf16.mxu0 0
    %247 = vmatpush2.bf16.msra.mxu0 0
    %248 = vmatprep.subr.bf16.mxu0 0
    %249 = vmatpush2.bf16.msra.mxu0 0
    %250 = vmatprep.mubr.bf16.mxu0 0
    %251 = vmatmul.mubr.bf16.gmra.mxu0 %v201
    %v252 = vpop.f32.mrf.mxu0
    %v253 = vadd.f32 0.0, %v252
    %v254 = vpop.f32.mrf.mxu0
    %v255 = vadd.f32 0.0, %v254
    %v256 = vpop.f32.mrf.mxu0
    %v257 = vadd.f32 0.0, %v256
    %v258 = vpop.f32.mrf.mxu0
    %v259 = vadd.f32 0.0, %v258
    %260 = vmatprep.mubr.bf16.mxu0 0
    %261 = vmatmul.mubr.bf16.gmra.mxu0 %v204
    %v262 = vpop.f32.mrf.mxu0
    %v263 = vadd.f32 0.0, %v262
    %v264 = vpop.f32.mrf.mxu0
    %v265 = vadd.f32 0.0, %v264
    %v266 = vpop.f32.mrf.mxu0
    %v267 = vadd.f32 0.0, %v266
    %v268 = vpop.f32.mrf.mxu0
    %v269 = vadd.f32 0.0, %v268
    %270 = vmatprep.mubr.bf16.mxu0 0
    %271 = vmatmul.mubr.bf16.gmra.mxu0 %v207
    %v272 = vpop.f32.mrf.mxu0
    %v273 = vadd.f32 0.0, %v272
    %v274 = vpop.f32.mrf.mxu0
    %v275 = vadd.f32 0.0, %v274
    %v276 = vpop.f32.mrf.mxu0
    %v277 = vadd.f32 0.0, %v276
    %v278 = vpop.f32.mrf.mxu0
    %v279 = vadd.f32 0.0, %v278
    %280 = vmatprep.mubr.bf16.mxu0 0
    %281 = vmatmul.mubr.bf16.gmra.mxu0 %v210
    %v282 = vpop.f32.mrf.mxu0
    %v283 = vadd.f32 0.0, %v282
    %v284 = vpop.f32.mrf.mxu0
    %v285 = vadd.f32 0.0, %v284
    %v286 = vpop.f32.mrf.mxu0
    %v287 = vadd.f32 0.0, %v286
    %v288 = vpop.f32.mrf.mxu0
    %v289 = vadd.f32 0.0, %v288
    %290 = vdwg.mxu0
    %291 = vst [vmem:[#allocation2 + $0x80] sm:$0xff] %v253
    %292 = vst [vmem:[#allocation2 + $0x88] sm:$0xff] %v255
    %293 = vst [vmem:[#allocation2 + $0x90] sm:$0xff] %v257
    %294 = vst [vmem:[#allocation2 + $0x98] sm:$0xff] %v259
    %295 = vst [vmem:[#allocation2 + $0xa0] sm:$0xff] %v263
    %296 = vst [vmem:[#allocation2 + $0xa8] sm:$0xff] %v265
    %297 = vst [vmem:[#allocation2 + $0xb0] sm:$0xff] %v267
    %298 = vst [vmem:[#allocation2 + $0xb8] sm:$0xff] %v269
    %299 = vst [vmem:[#allocation2 + $0xc0] sm:$0xff] %v273
    %300 = vst [vmem:[#allocation2 + $0xc8] sm:$0xff] %v275
    %301 = vst [vmem:[#allocation2 + $0xd0] sm:$0xff] %v277
    %302 = vst [vmem:[#allocation2 + $0xd8] sm:$0xff] %v279
    %303 = vst [vmem:[#allocation2 + $0xe0] sm:$0xff] %v283
    %304 = vst [vmem:[#allocation2 + $0xe8] sm:$0xff] %v285
    %305 = vst [vmem:[#allocation2 + $0xf0] sm:$0xff] %v287
    %306 = vst [vmem:[#allocation2 + $0xf8] sm:$0xff] %v289
    %v307 = vld [vmem:[#allocation2] sm:$0xff]
    %v308 = vld [vmem:[#allocation2 + $0x8] sm:$0xff]
    %v309 = vld [vmem:[#allocation2 + $0x10] sm:$0xff]
    %v310 = vld [vmem:[#allocation2 + $0x18] sm:$0xff]
    %313 = vrot.lane.b32.xlu0 %v309, 112
    %v314 = vpop.permute.xlu0 %313
    %315 = vrot.lane.b32.xlu0 %v310, 112
    %v316 = vpop.permute.xlu0 %315
    %vm317 = vcmask 916480
    %v318 = vsel %vm317, %v314, %v316
    %v321 = vadd.f32 %v307, %v318
    %v322 = vadd.f32 %v308, %v316
    %v323 = vld [vmem:[#allocation2 + $0x20] sm:$0xff]
    %v324 = vld [vmem:[#allocation2 + $0x28] sm:$0xff]
    %327 = vrot.lane.b32.xlu0 %v323, 96
    %v328 = vpop.permute.xlu0 %327
    %329 = vrot.lane.b32.xlu0 %v324, 96
    %v330 = vpop.permute.xlu0 %329
    %vm331 = vcmask 785408
    %v332 = vsel %vm331, %v328, %v330
    %v335 = vadd.f32 %v321, %v332
    %v336 = vadd.f32 %v322, %v330
    %v337 = vld [vmem:[#allocation2 + $0x30] sm:$0xff]
    %v338 = vld [vmem:[#allocation2 + $0x38] sm:$0xff]
    %341 = vrot.lane.b32.xlu0 %v337, 80
    %v342 = vpop.permute.xlu0 %341
    %343 = vrot.lane.b32.xlu0 %v338, 80
    %v344 = vpop.permute.xlu0 %343
    %vm345 = vcmask 654336
    %v346 = vsel %vm345, %v342, %v344
    %v349 = vadd.f32 %v335, %v346
    %v350 = vadd.f32 %v336, %v344
    %v351 = vld [vmem:[#allocation2 + $0x40] sm:$0xff]
    %v352 = vld [vmem:[#allocation2 + $0x48] sm:$0xff]
    %355 = vrot.lane.b32.xlu0 %v351, 64
    %v356 = vpop.permute.xlu0 %355
    %357 = vrot.lane.b32.xlu0 %v352, 64
    %v358 = vpop.permute.xlu0 %357
    %vm359 = vcmask 523264
    %v360 = vsel %vm359, %v356, %v358
    %v363 = vadd.f32 %v349, %v360
    %v364 = vadd.f32 %v350, %v358
    %v365 = vld [vmem:[#allocation2 + $0x50] sm:$0xff]
    %v366 = vld [vmem:[#allocation2 + $0x58] sm:$0xff]
    %369 = vrot.lane.b32.xlu0 %v365, 48
    %v370 = vpop.permute.xlu0 %369
    %371 = vrot.lane.b32.xlu0 %v366, 48
    %v372 = vpop.permute.xlu0 %371
    %vm373 = vcmask 392192
    %v374 = vsel %vm373, %v370, %v372
    %v377 = vadd.f32 %v363, %v374
    %v378 = vadd.f32 %v364, %v372
    %v379 = vld [vmem:[#allocation2 + $0x60] sm:$0xff]
    %v380 = vld [vmem:[#allocation2 + $0x68] sm:$0xff]
    %383 = vrot.lane.b32.xlu0 %v379, 32
    %v384 = vpop.permute.xlu0 %383
    %385 = vrot.lane.b32.xlu0 %v380, 32
    %v386 = vpop.permute.xlu0 %385
    %vm387 = vcmask 261120
    %v388 = vsel %vm387, %v384, %v386
    %v391 = vadd.f32 %v377, %v388
    %v392 = vadd.f32 %v378, %v386
    %v393 = vld [vmem:[#allocation2 + $0x70] sm:$0xff]
    %v394 = vld [vmem:[#allocation2 + $0x78] sm:$0xff]
    %397 = vrot.lane.b32.xlu0 %v393, 16
    %v398 = vpop.permute.xlu0 %397
    %399 = vrot.lane.b32.xlu0 %v394, 16
    %v400 = vpop.permute.xlu0 %399
    %vm401 = vcmask 130048
    %v402 = vsel %vm401, %v398, %v400
    %v405 = vadd.f32 %v391, %v402
    %v406 = vadd.f32 %v392, %v400
    %v409 = vrot.slane %v405, 1
    %v410 = vrot.slane %v406, 1
    %411 = vrot.lane.b32.xlu0 %v409, 127
    %v412 = vpop.permute.xlu0 %411
    %413 = vrot.lane.b32.xlu0 %v410, 127
    %v414 = vpop.permute.xlu0 %413
    %vm415 = vcmask 1039360
    %v416 = vsel %vm415, %v412, %v414
    %v419 = vadd.f32 %v405, %v416
    %v420 = vadd.f32 %v406, %v414
    %v421 = vrot.slane %v405, 2
    %v422 = vrot.slane %v406, 2
    %423 = vrot.lane.b32.xlu0 %v421, 126
    %v424 = vpop.permute.xlu0 %423
    %425 = vrot.lane.b32.xlu0 %v422, 126
    %v426 = vpop.permute.xlu0 %425
    %vm427 = vcmask 1031168
    %v428 = vsel %vm427, %v424, %v426
    %v431 = vadd.f32 %v419, %v428
    %v432 = vadd.f32 %v420, %v426
    %v433 = vrot.slane %v405, 3
    %v434 = vrot.slane %v406, 3
    %435 = vrot.lane.b32.xlu0 %v433, 125
    %v436 = vpop.permute.xlu0 %435
    %437 = vrot.lane.b32.xlu0 %v434, 125
    %v438 = vpop.permute.xlu0 %437
    %vm439 = vcmask 1022976
    %v440 = vsel %vm439, %v436, %v438
    %v443 = vadd.f32 %v431, %v440
    %v444 = vadd.f32 %v432, %v438
    %v445 = vrot.slane %v405, 4
    %v446 = vrot.slane %v406, 4
    %447 = vrot.lane.b32.xlu0 %v445, 124
    %v448 = vpop.permute.xlu0 %447
    %449 = vrot.lane.b32.xlu0 %v446, 124
    %v450 = vpop.permute.xlu0 %449
    %vm451 = vcmask 1014784
    %v452 = vsel %vm451, %v448, %v450
    %v455 = vadd.f32 %v443, %v452
    %v456 = vadd.f32 %v444, %v450
    %v457 = vrot.slane %v405, 5
    %v458 = vrot.slane %v406, 5
    %459 = vrot.lane.b32.xlu0 %v457, 123
    %v460 = vpop.permute.xlu0 %459
    %461 = vrot.lane.b32.xlu0 %v458, 123
    %v462 = vpop.permute.xlu0 %461
    %vm463 = vcmask 1006592
    %v464 = vsel %vm463, %v460, %v462
    %v467 = vadd.f32 %v455, %v464
    %v468 = vadd.f32 %v456, %v462
    %v469 = vrot.slane %v405, 6
    %v470 = vrot.slane %v406, 6
    %471 = vrot.lane.b32.xlu0 %v469, 122
    %v472 = vpop.permute.xlu0 %471
    %473 = vrot.lane.b32.xlu0 %v470, 122
    %v474 = vpop.permute.xlu0 %473
    %vm475 = vcmask 998400
    %v476 = vsel %vm475, %v472, %v474
    %v479 = vadd.f32 %v467, %v476
    %v480 = vadd.f32 %v468, %v474
    %v481 = vrot.slane %v405, 7
    %v482 = vrot.slane %v406, 7
    %483 = vrot.lane.b32.xlu0 %v481, 121
    %v484 = vpop.permute.xlu0 %483
    %485 = vrot.lane.b32.xlu0 %v482, 121
    %v486 = vpop.permute.xlu0 %485
    %vm487 = vcmask 990208
    %v488 = vsel %vm487, %v484, %v486
    %v491 = vadd.f32 %v479, %v488
    %v492 = vadd.f32 %v480, %v486
    %v493 = vld [vmem:[#allocation2 + $0x80] sm:$0xff]
    %v494 = vld [vmem:[#allocation2 + $0x88] sm:$0xff]
    %v495 = vld [vmem:[#allocation2 + $0x90] sm:$0xff]
    %v496 = vld [vmem:[#allocation2 + $0x98] sm:$0xff]
    %499 = vrot.lane.b32.xlu0 %v495, 112
    %v500 = vpop.permute.xlu0 %499
    %501 = vrot.lane.b32.xlu0 %v496, 112
    %v502 = vpop.permute.xlu0 %501
    %v503 = vsel %vm317, %v500, %v502
    %v506 = vadd.f32 %v493, %v503
    %v507 = vadd.f32 %v494, %v502
    %v508 = vld [vmem:[#allocation2 + $0xa0] sm:$0xff]
    %v509 = vld [vmem:[#allocation2 + $0xa8] sm:$0xff]
    %512 = vrot.lane.b32.xlu0 %v508, 96
    %v513 = vpop.permute.xlu0 %512
    %514 = vrot.lane.b32.xlu0 %v509, 96
    %v515 = vpop.permute.xlu0 %514
    %v516 = vsel %vm331, %v513, %v515
    %v519 = vadd.f32 %v506, %v516
    %v520 = vadd.f32 %v507, %v515
    %v521 = vld [vmem:[#allocation2 + $0xb0] sm:$0xff]
    %v522 = vld [vmem:[#allocation2 + $0xb8] sm:$0xff]
    %525 = vrot.lane.b32.xlu0 %v521, 80
    %v526 = vpop.permute.xlu0 %525
    %527 = vrot.lane.b32.xlu0 %v522, 80
    %v528 = vpop.permute.xlu0 %527
    %v529 = vsel %vm345, %v526, %v528
    %v532 = vadd.f32 %v519, %v529
    %v533 = vadd.f32 %v520, %v528
    %v534 = vld [vmem:[#allocation2 + $0xc0] sm:$0xff]
    %v535 = vld [vmem:[#allocation2 + $0xc8] sm:$0xff]
    %538 = vrot.lane.b32.xlu0 %v534, 64
    %v539 = vpop.permute.xlu0 %538
    %540 = vrot.lane.b32.xlu0 %v535, 64
    %v541 = vpop.permute.xlu0 %540
    %v542 = vsel %vm359, %v539, %v541
    %v545 = vadd.f32 %v532, %v542
    %v546 = vadd.f32 %v533, %v541
    %v547 = vld [vmem:[#allocation2 + $0xd0] sm:$0xff]
    %v548 = vld [vmem:[#allocation2 + $0xd8] sm:$0xff]
    %551 = vrot.lane.b32.xlu0 %v547, 48
    %v552 = vpop.permute.xlu0 %551
    %553 = vrot.lane.b32.xlu0 %v548, 48
    %v554 = vpop.permute.xlu0 %553
    %v555 = vsel %vm373, %v552, %v554
    %v558 = vadd.f32 %v545, %v555
    %v559 = vadd.f32 %v546, %v554
    %v560 = vld [vmem:[#allocation2 + $0xe0] sm:$0xff]
    %v561 = vld [vmem:[#allocation2 + $0xe8] sm:$0xff]
    %564 = vrot.lane.b32.xlu0 %v560, 32
    %v565 = vpop.permute.xlu0 %564
    %566 = vrot.lane.b32.xlu0 %v561, 32
    %v567 = vpop.permute.xlu0 %566
    %v568 = vsel %vm387, %v565, %v567
    %v571 = vadd.f32 %v558, %v568
    %v572 = vadd.f32 %v559, %v567
    %v573 = vld [vmem:[#allocation2 + $0xf0] sm:$0xff]
    %v574 = vld [vmem:[#allocation2 + $0xf8] sm:$0xff]
    %577 = vrot.lane.b32.xlu0 %v573, 16
    %v578 = vpop.permute.xlu0 %577
    %579 = vrot.lane.b32.xlu0 %v574, 16
    %v580 = vpop.permute.xlu0 %579
    %v581 = vsel %vm401, %v578, %v580
    %v584 = vadd.f32 %v571, %v581
    %v585 = vadd.f32 %v572, %v580
    %v588 = vrot.slane %v584, 1
    %v589 = vrot.slane %v585, 1
    %590 = vrot.lane.b32.xlu0 %v588, 127
    %v591 = vpop.permute.xlu0 %590
    %592 = vrot.lane.b32.xlu0 %v589, 127
    %v593 = vpop.permute.xlu0 %592
    %v594 = vsel %vm415, %v591, %v593
    %v597 = vadd.f32 %v584, %v594
    %v598 = vadd.f32 %v585, %v593
    %v599 = vrot.slane %v584, 2
    %v600 = vrot.slane %v585, 2
    %601 = vrot.lane.b32.xlu0 %v599, 126
    %v602 = vpop.permute.xlu0 %601
    %603 = vrot.lane.b32.xlu0 %v600, 126
    %v604 = vpop.permute.xlu0 %603
    %v605 = vsel %vm427, %v602, %v604
    %v608 = vadd.f32 %v597, %v605
    %v609 = vadd.f32 %v598, %v604
    %v610 = vrot.slane %v584, 3
    %v611 = vrot.slane %v585, 3
    %612 = vrot.lane.b32.xlu0 %v610, 125
    %v613 = vpop.permute.xlu0 %612
    %614 = vrot.lane.b32.xlu0 %v611, 125
    %v615 = vpop.permute.xlu0 %614
    %v616 = vsel %vm439, %v613, %v615
    %v619 = vadd.f32 %v608, %v616
    %v620 = vadd.f32 %v609, %v615
    %v621 = vrot.slane %v584, 4
    %v622 = vrot.slane %v585, 4
    %623 = vrot.lane.b32.xlu0 %v621, 124
    %v624 = vpop.permute.xlu0 %623
    %625 = vrot.lane.b32.xlu0 %v622, 124
    %v626 = vpop.permute.xlu0 %625
    %v627 = vsel %vm451, %v624, %v626
    %v630 = vadd.f32 %v619, %v627
    %v631 = vadd.f32 %v620, %v626
    %v632 = vrot.slane %v584, 5
    %v633 = vrot.slane %v585, 5
    %634 = vrot.lane.b32.xlu0 %v632, 123
    %v635 = vpop.permute.xlu0 %634
    %636 = vrot.lane.b32.xlu0 %v633, 123
    %v637 = vpop.permute.xlu0 %636
    %v638 = vsel %vm463, %v635, %v637
    %v641 = vadd.f32 %v630, %v638
    %v642 = vadd.f32 %v631, %v637
    %v643 = vrot.slane %v584, 6
    %v644 = vrot.slane %v585, 6
    %645 = vrot.lane.b32.xlu0 %v643, 122
    %v646 = vpop.permute.xlu0 %645
    %647 = vrot.lane.b32.xlu0 %v644, 122
    %v648 = vpop.permute.xlu0 %647
    %v649 = vsel %vm475, %v646, %v648
    %v652 = vadd.f32 %v641, %v649
    %v653 = vadd.f32 %v642, %v648
    %v654 = vrot.slane %v584, 7
    %v655 = vrot.slane %v585, 7
    %656 = vrot.lane.b32.xlu0 %v654, 121
    %v657 = vpop.permute.xlu0 %656
    %658 = vrot.lane.b32.xlu0 %v655, 121
    %v659 = vpop.permute.xlu0 %658
    %v660 = vsel %vm487, %v657, %v659
    %v663 = vadd.f32 %v652, %v660
    %v664 = vadd.f32 %v653, %v659
    %v667 = vrot.slane %v663, 7
    %v668 = vrot.slane %v664, 7
    %vm671 = vcmask 1040384
    %v672 = vsel %vm671, %v491, %v667
    %v673 = vsel %vm671, %v492, %v668
    %v674 = vmul.f32 %v672, 0.1
    %v675 = vmul.f32 %v673, 0.1
    %v678 = vcombine.low %v674, %v675
    %v680 = vunpack.c.l.s4 1983009808
    %v681 = vunpack.c.0.s8 %v680
    %v682 = vlaneseq
    %v683 = vshrl.u32 %v682, 7
    %v684 = vsub.s32 %v681, %v683
    %v685 = vrot.slane %v678, %v684
    %vm687 = vcmask 68610
    %vm688 = vmor %vm687, %vm64
    %689 = vst.msk [vmem:[#allocation3] sm:$0xf] %vm688, %v685
    // Predicated region
    $region10: #{tpu_custom_call.1} parent=1 // pred_check
      _
    $region11: #{tpu_custom_call.1} parent=1 // pred_check_branch
      %691 = sbr.rel (0) target = $region13
    $region12: #{tpu_custom_call.1} parent=1 // pred_region
      %s693 = ssub.s32 64, 64
      %694 = vsyncadd [#allocation4], %s693
      %s696 = sshll.u32 [#allocation3], 4
      %s697 = int_to_ptr.vmem [resolvable:$true] %s696
      %699 = dma.vmem_to_hbm [thread:$0]  %s697, 64, %s2, [#allocation4]
    $region13: #{tpu_custom_call.1} parent=1 // pred_fallthru
      _
    // Predicated region
    $region14: #{tpu_custom_call.1} parent=1 // pred_check
      _
    $region15: #{tpu_custom_call.1} parent=1 // pred_check_branch
      %701 = sbr.rel (0) target = $region17
    $region16: #{tpu_custom_call.1} parent=1 // pred_region
      %702 = dma.done [#allocation4], 64
    $region17: #{tpu_custom_call.1} parent=1 // pred_fallthru
      _
    %703 = vsyncpa [#allocation4], 1

</llo_original>
